<compile_context>
chip_gen: v5e
topology: v5e:2x2
jax: 0.10.0
libtpu: 0.0.40
codegen_flags: <defaults>
</compile_context>

<pallas_src>
import functools

import jax
import jax.numpy as jnp
from jax.experimental import pallas as pl
from jax.experimental.pallas import tpu as pltpu


def _round_up(x, m):
    return (x + m - 1) // m * m


# Per-grid-step VMEM footprint estimate (bytes): double-buffered C/out tiles,
# resident (buffered) weights, and the f32 hidden intermediate.
def _vmem_bytes(tm, basis_p, hid_p, n_out, in_bytes):
    est = 2 * tm * basis_p * in_bytes                       # C tile, 2 buffers
    est += 2 * tm * n_out * 4                               # out tile, 2 buffers
    est += 2 * basis_p * hid_p * in_bytes                   # W1
    est += 2 * (hid_p * 4 + hid_p * n_out * 4 + n_out * 4)  # b1, W2, b2
    est += 2 * tm * hid_p * 4                               # f32 hidden + slack
    return est


_VMEM_SOFT_BUDGET = 30 * 1024 * 1024   # keep per-step footprint v7x-safe (64 MiB VMEM)
_VMEM_LIMIT_CAP = 48 * 1024 * 1024


# ---------------------------------------------------------------------------
# Kernels
# ---------------------------------------------------------------------------
def _mlp_single_kernel(c_ref, w1_ref, b1_ref, w2_ref, b2_ref, o_ref):
    # (tm, basis_p) @ (basis_p, hid_p) -> tanh -> @ (hid_p, T) + bias
    h = jnp.tanh(
        jnp.dot(c_ref[...], w1_ref[...], preferred_element_type=jnp.float32)
        + b1_ref[...]
    )
    o = jnp.dot(h, w2_ref[...], preferred_element_type=jnp.float32) + b2_ref[...]
    o_ref[...] = o.astype(o_ref.dtype)


def _mlp_multi_kernel(c_ref, w1_ref, b1_ref, w2_ref, b2_ref, o_ref, *, T, H):
    # First layers of all T per-target MLPs fused along the hidden axis.
    h = jnp.tanh(
        jnp.dot(c_ref[...], w1_ref[...], preferred_element_type=jnp.float32)
        + b1_ref[...]
    )                                           # (tm, hid_p) f32
    w2 = w2_ref[...]                            # (T, H) f32
    # Second layers (hidden -> 1 per target): multiply + lane-reduce on
    # VPU/XLU slots instead of a (T*H, T) block-diagonal MXU matmul.
    cols = [
        jnp.sum(h[:, t * H:(t + 1) * H] * w2[t:t + 1, :], axis=-1, keepdims=True)
        for t in range(T)
    ]
    o = jnp.concatenate(cols, axis=-1) + b2_ref[...]        # (tm, T)
    o_ref[...] = o.astype(o_ref.dtype)


# ---------------------------------------------------------------------------
# pallas_call wrapper
# ---------------------------------------------------------------------------
def mlp_forward(c2d, w1, b1, w2, b2, *, multi, T, H,
                tm=512, compute_dtype=jnp.bfloat16):
    """c2d: [M, basis]; w1: [basis_p, hid_p]; b1: [1, hid_p];
    w2: [hid_p, T] (single) or [T, H] (multi); b2: [1, T].  Returns [M, T] f32."""
    M, basis = c2d.shape
    basis_p, hid_p = w1.shape
    in_bytes = jnp.dtype(compute_dtype).itemsize

    # Row tile: as large as fits the VMEM budget (amortizes ~0.35us/step and
    # issues full-size DMAs), clamped to the (sublane-rounded) problem size.
    tm = max(8, min(int(tm), _round_up(M, 8)))
    tm = (tm // 8) * 8
    while tm > 8 and _vmem_bytes(tm, basis_p, hid_p, T, in_bytes) > _VMEM_SOFT_BUDGET:
        tm = max(8, (tm // 2) // 8 * 8)

    # Pad rows to a multiple of tm and features to the padded basis, then
    # stream C (and W1) in the compute dtype; biases / second layer stay f32.
    M_pad = _round_up(M, tm)
    c2d = jnp.pad(c2d, ((0, M_pad - M), (0, basis_p - basis))).astype(compute_dtype)
    w1 = w1.astype(compute_dtype)
    b1 = b1.astype(jnp.float32)
    w2 = w2.astype(jnp.float32)
    b2 = b2.astype(jnp.float32)

    grid = (M_pad // tm,)
    kernel = (functools.partial(_mlp_multi_kernel, T=T, H=H)
              if multi else _mlp_single_kernel)

    est = _vmem_bytes(tm, basis_p, hid_p, T, in_bytes)
    vmem_limit = int(min(_VMEM_LIMIT_CAP, max(32 * 1024 * 1024, 2 * est)))

    out = pl.pallas_call(
        kernel,
        out_shape=jax.ShapeDtypeStruct((M_pad, T), jnp.float32),
        grid=grid,
        in_specs=[
            pl.BlockSpec((tm, basis_p), lambda i: (i, 0)),
            pl.BlockSpec(w1.shape, lambda i: (0, 0)),
            pl.BlockSpec(b1.shape, lambda i: (0, 0)),
            pl.BlockSpec(w2.shape, lambda i: (0, 0)),
            pl.BlockSpec(b2.shape, lambda i: (0, 0)),
        ],
        out_specs=pl.BlockSpec((tm, T), lambda i: (i, 0)),
        compiler_params=pltpu.CompilerParams(
            dimension_semantics=("parallel",),
            vmem_limit_bytes=vmem_limit,
        ),
    )(c2d, w1, b1, w2, b2)
    return out[:M]


# ---------------------------------------------------------------------------
# TargetLayer wrapper (parameter setup / reshapes are plain-JAX glue)
# ---------------------------------------------------------------------------
class TargetLayerPallas:
    def __init__(self, basis, hidden, target_sz, target_type, key, *,
                 tm=512, compute_dtype=jnp.bfloat16):
        self.basis = basis
        self.hidden = hidden
        self.target_sz = target_sz
        self.target_type = target_type
        self.tm = tm
        self.compute_dtype = compute_dtype

        basis_p = _round_up(basis, 8)

        if target_type == "single":
            k1, k2, k3, k4 = jax.random.split(key, 4)
            w1 = jax.random.normal(k1, (basis, hidden), jnp.float32) * 0.1
            b1 = jax.random.normal(k2, (hidden,), jnp.float32) * 0.1
            w2 = jax.random.normal(k3, (hidden, target_sz), jnp.float32) * 0.1
            b2 = jax.random.normal(k4, (target_sz,), jnp.float32) * 0.1
            self._ref_params = (w1, b1, w2, b2)

            hid_p = _round_up(hidden, 128)      # lane-align the hidden axis
            self.w1 = jnp.zeros((basis_p, hid_p), jnp.float32).at[:basis, :hidden].set(w1)
            self.b1 = jnp.zeros((1, hid_p), jnp.float32).at[0, :hidden].set(b1)
            self.w2 = jnp.zeros((hid_p, target_sz), jnp.float32).at[:hidden, :].set(w2)
            self.b2 = b2.reshape(1, target_sz)
        else:
            T = target_sz
            k1, k2, k3, k4 = jax.random.split(key, 4)
            w1_all = jax.random.normal(k1, (T, basis, hidden), jnp.float32) * 0.1
            b1_all = jax.random.normal(k2, (T, hidden), jnp.float32) * 0.1
            w2_all = jax.random.normal(k3, (T, hidden), jnp.float32) * 0.1   # -> 1 out
            b2_all = jax.random.normal(k4, (T,), jnp.float32) * 0.1
            self._ref_params = (w1_all, b1_all, w2_all, b2_all)

            # Fuse the T first layers along the hidden axis:
            #   W1cat[:, t*H + h] = w1_all[t, :, h]
            hid_cat = T * hidden
            hid_p = _round_up(hid_cat, 128)     # lane-align the fused hidden axis
            w1_cat = jnp.transpose(w1_all, (1, 0, 2)).reshape(basis, hid_cat)
            b1_cat = b1_all.reshape(1, hid_cat)
            self.w1 = jnp.zeros((basis_p, hid_p), jnp.float32).at[:basis, :hid_cat].set(w1_cat)
            self.b1 = jnp.zeros((1, hid_p), jnp.float32).at[:, :hid_cat].set(b1_cat)
            self.w2 = w2_all                    # (T, hidden): consumed as mul + reduce
            self.b2 = b2_all.reshape(1, T)

        # Pre-cast the streamed weight once.
        self.w1 = self.w1.astype(compute_dtype)

    def __call__(self, C):
        # C: [B, S, basis]
        B, S, basis = C.shape
        assert basis == self.basis
        c2d = C.reshape(B * S, basis)
        out2d = mlp_forward(
            c2d, self.w1, self.b1, self.w2, self.b2,
            multi=(self.target_type != "single"),
            T=self.target_sz, H=self.hidden,
            tm=self.tm, compute_dtype=self.compute_dtype)
        return out2d.reshape(B, S, self.target_sz)

    # Pure-JAX reference (mirrors the PyTorch forward exactly, f32).
    def reference(self, C):
        hp = jax.lax.Precision.HIGHEST
        if self.target_type == "single":
            w1, b1, w2, b2 = self._ref_params
            h = jnp.tanh(jnp.dot(C, w1, precision=hp) + b1)
            return jnp.dot(h, w2, precision=hp) + b2
        else:
            w1_all, b1_all, w2_all, b2_all = self._ref_params
            outs = []
            for t in range(self.target_sz):
                h = jnp.tanh(jnp.dot(C, w1_all[t], precision=hp) + b1_all[t])   # [B,S,H]
                o = jnp.dot(h, w2_all[t][:, None], precision=hp) + b2_all[t]    # [B,S,1]
                outs.append(o)
            return jnp.concatenate(outs, axis=2)                                # [B,S,T]


if __name__ == "__main__":
    key = jax.random.PRNGKey(0)
    k_in, k_single, k_multi = jax.random.split(key, 3)

    B, S, basis, hidden, target_sz = 2, 8, 32, 32, 4
    C = jax.random.normal(k_in, (B, S, basis), jnp.float32)

    ok = True
    configs = [
        (jnp.float32, 1e-4, 1e-4),    # full-precision path
        (jnp.bfloat16, 2e-2, 2e-2),   # bf16-streaming fast path (f32 accumulation)
    ]
    for target_type, k_layer in (("single", k_single), ("multi", k_multi)):
        for cdt, atol, rtol in configs:
            layer = TargetLayerPallas(basis, hidden, target_sz, target_type,
                                      k_layer, tm=512, compute_dtype=cdt)
            out = jax.block_until_ready(layer(C))
            ref = layer.reference(C)
            ok &= out.shape == (B, S, target_sz)
            ok &= bool(jnp.allclose(out, ref, atol=atol, rtol=rtol))

    if ok:
        print("KERNEL_OK")
    else:
        raise SystemExit("mismatch vs reference")
</pallas_src>

<mosaic_0001>
module attributes {stable_mosaic.version = 11 : i64} {
  func.func @_mlp_single_kernel(%arg0: i32, %arg1: memref<16x32xf32, #tpu.memory_space<vmem>>, %arg2: memref<32x128xf32, #tpu.memory_space<vmem>>, %arg3: memref<1x128xf32, #tpu.memory_space<vmem>>, %arg4: memref<128x4xf32, #tpu.memory_space<vmem>>, %arg5: memref<1x4xf32, #tpu.memory_space<vmem>>, %arg6: memref<16x4xf32, #tpu.memory_space<vmem>>) attributes {dimension_semantics = [#tpu.dimension_semantics<parallel>], iteration_bounds = array<i64: 1>, scalar_prefetch = 0 : i64, scratch_operands = 0 : i64, tpu.core_type = #tpu.core_type<tc>, window_params = [{transform_indices = @transform_0, window_bounds = array<i64: 16, 32>}, {pipeline_mode = #tpu.pipeline_mode<synchronous>, transform_indices = @transform_1, window_bounds = array<i64: 32, 128>}, {pipeline_mode = #tpu.pipeline_mode<synchronous>, transform_indices = @transform_2, window_bounds = array<i64: 1, 128>}, {pipeline_mode = #tpu.pipeline_mode<synchronous>, transform_indices = @transform_3, window_bounds = array<i64: 128, 4>}, {pipeline_mode = #tpu.pipeline_mode<synchronous>, transform_indices = @transform_4, window_bounds = array<i64: 1, 4>}, {transform_indices = @transform_5, window_bounds = array<i64: 16, 4>}]} {
    %c0 = arith.constant 0 : index
    %c0_0 = arith.constant 0 : index
    %0 = vector.load %arg1[%c0, %c0_0] : memref<16x32xf32, #tpu.memory_space<vmem>>, vector<16x32xf32>
    %c0_1 = arith.constant 0 : index
    %c0_2 = arith.constant 0 : index
    %1 = vector.load %arg2[%c0_1, %c0_2] : memref<32x128xf32, #tpu.memory_space<vmem>>, vector<32x128xf32>
    %cst = arith.constant dense<0.000000e+00> : vector<16x128xf32>
    %2 = tpu.matmul %0, %1, %cst {dimension_numbers = #tpu.dot_dimension_numbers<[1], [0], [0], [1], [0, 0, 1, 1], [], []>} : vector<16x32xf32>, vector<32x128xf32>, vector<16x128xf32> -> vector<16x128xf32>
    %c0_3 = arith.constant 0 : index
    %c0_4 = arith.constant 0 : index
    %3 = vector.load %arg3[%c0_3, %c0_4] : memref<1x128xf32, #tpu.memory_space<vmem>>, vector<1x128xf32>
    %4 = vector.broadcast %3 : vector<1x128xf32> to vector<16x128xf32>
    %5 = arith.addf %2, %4 : vector<16x128xf32>
    %6 = math.tanh %5 : vector<16x128xf32>
    %c0_5 = arith.constant 0 : index
    %c0_6 = arith.constant 0 : index
    %7 = vector.load %arg4[%c0_5, %c0_6] : memref<128x4xf32, #tpu.memory_space<vmem>>, vector<128x4xf32>
    %cst_7 = arith.constant dense<0.000000e+00> : vector<16x4xf32>
    %8 = tpu.matmul %6, %7, %cst_7 {dimension_numbers = #tpu.dot_dimension_numbers<[1], [0], [0], [1], [0, 0, 1, 1], [], []>} : vector<16x128xf32>, vector<128x4xf32>, vector<16x4xf32> -> vector<16x4xf32>
    %c0_8 = arith.constant 0 : index
    %c0_9 = arith.constant 0 : index
    %9 = vector.load %arg5[%c0_8, %c0_9] : memref<1x4xf32, #tpu.memory_space<vmem>>, vector<1x4xf32>
    %10 = vector.broadcast %9 : vector<1x4xf32> to vector<16x4xf32>
    %11 = arith.addf %8, %10 : vector<16x4xf32>
    %c0_10 = arith.constant 0 : index
    %c0_11 = arith.constant 0 : index
    %12 = vector.load %arg6[%c0_10, %c0_11] : memref<16x4xf32, #tpu.memory_space<vmem>>, vector<16x4xf32>
    tpu.vector_store %arg6[%c0_10, %c0_11], %11 {strides = array<i32>} : memref<16x4xf32, #tpu.memory_space<vmem>>, vector<16x4xf32>,
    return
  }
  func.func @transform_0(%arg0: i32) -> (i32, i32) {
    %c0_i32 = arith.constant 0 : i32
    %c0_i32_0 = arith.constant 0 : i32
    return %arg0, %c0_i32 : i32, i32
  }
  func.func @transform_1(%arg0: i32) -> (i32, i32) {
    %c0_i32 = arith.constant 0 : i32
    %c0_i32_0 = arith.constant 0 : i32
    %c0_i32_1 = arith.constant 0 : i32
    return %c0_i32, %c0_i32_0 : i32, i32
  }
  func.func @transform_2(%arg0: i32) -> (i32, i32) {
    %c0_i32 = arith.constant 0 : i32
    %c0_i32_0 = arith.constant 0 : i32
    %c0_i32_1 = arith.constant 0 : i32
    return %c0_i32, %c0_i32_0 : i32, i32
  }
  func.func @transform_3(%arg0: i32) -> (i32, i32) {
    %c0_i32 = arith.constant 0 : i32
    %c0_i32_0 = arith.constant 0 : i32
    %c0_i32_1 = arith.constant 0 : i32
    return %c0_i32, %c0_i32_0 : i32, i32
  }
  func.func @transform_4(%arg0: i32) -> (i32, i32) {
    %c0_i32 = arith.constant 0 : i32
    %c0_i32_0 = arith.constant 0 : i32
    %c0_i32_1 = arith.constant 0 : i32
    return %c0_i32, %c0_i32_0 : i32, i32
  }
  func.func @transform_5(%arg0: i32) -> (i32, i32) {
    %c0_i32 = arith.constant 0 : i32
    %c0_i32_0 = arith.constant 0 : i32
    return %arg0, %c0_i32 : i32, i32
  }
}

</mosaic_0001>

<llo_original>
// kernel: tpu_custom_call.1
$region0: #{tpu_custom_call.1}
  #allocation0 [shape = 'u32[]', space=smem, size = 0x4, offset = 0x4, fixed_abs, tag = 'smem constant byte address 0x4 - core index']
  #allocation1 [shape = 'u32[72,128]{1,0:T(1,128)}', space=vmem, size = 0x9000, scoped, tag = 'internal scratch']
  %s0 = inlined_call_operand.vmem [shape: f32[16,32], index: 0, kind: input, shape index: {}]
  %s1 = inlined_call_operand.vmem [shape: f32[32,128], index: 1, kind: input, shape index: {}]
  %s2 = inlined_call_operand.vmem [shape: f32[1,128], index: 2, kind: input, shape index: {}]
  %s3 = inlined_call_operand.vmem [shape: f32[128,4], index: 3, kind: input, shape index: {}]
  %s4 = inlined_call_operand.vmem [shape: f32[1,4], index: 4, kind: input, shape index: {}]
  %s5 = inlined_call_operand.vmem [shape: f32[16,4], index: 5, kind: output, shape index: {}]
  %s6 = sld [smem:[#allocation0]]
  $region30: #{tpu_custom_call.1} parent=0
    _
  %s8 = ssub.s32 1, %s6
  %s9 = scalar_select 0, %s8, %s6
  // Predicated region
  $region2: #{tpu_custom_call.1} parent=0 // pred_check
    _
  $region3: #{tpu_custom_call.1} parent=0 // pred_check_branch
    %11 = sbr.rel (0) target = $region5
  $region4: #{tpu_custom_call.1} parent=0 // pred_region
    _
  $region5: #{tpu_custom_call.1} parent=0 // pred_fallthru
    _
  // Predicated region
  $region6: #{tpu_custom_call.1} parent=0 // pred_check
    _
  $region7: #{tpu_custom_call.1} parent=0 // pred_check_branch
    %13 = sbr.rel (0) target = $region9
  $region8: #{tpu_custom_call.1} parent=0 // pred_region
    _
  $region9: #{tpu_custom_call.1} parent=0 // pred_fallthru
    _
  // Predicated region
  $region10: #{tpu_custom_call.1} parent=0 // pred_check
    _
  $region11: #{tpu_custom_call.1} parent=0 // pred_check_branch
    %15 = sbr.rel (0) target = $region13
  $region12: #{tpu_custom_call.1} parent=0 // pred_region
    _
  $region13: #{tpu_custom_call.1} parent=0 // pred_fallthru
    _
  // Predicated region
  $region14: #{tpu_custom_call.1} parent=0 // pred_check
    _
  $region15: #{tpu_custom_call.1} parent=0 // pred_check_branch
    %17 = sbr.rel (0) target = $region17
  $region16: #{tpu_custom_call.1} parent=0 // pred_region
    _
  $region17: #{tpu_custom_call.1} parent=0 // pred_fallthru
    _
  // Predicated region
  $region18: #{tpu_custom_call.1} parent=0 // pred_check
    _
  $region19: #{tpu_custom_call.1} parent=0 // pred_check_branch
    %19 = sbr.rel (0) target = $region21
  $region20: #{tpu_custom_call.1} parent=0 // pred_region
    _
  $region21: #{tpu_custom_call.1} parent=0 // pred_fallthru
    _
  %v20 = vld [vmem:[%s0] sm:$0xff]
  %v21 = vld [vmem:[%s0 + $0x8] sm:$0xff]
  %v22 = vld [vmem:[%s1] sm:$0xff]
  %v23 = vld [vmem:[%s1 + $0x8] sm:$0xff]
  %v24 = vld [vmem:[%s1 + $0x10] sm:$0xff]
  %v25 = vld [vmem:[%s1 + $0x18] sm:$0xff]
  %v26 = vld [vmem:[%s2] sm:$0x1]
  %v28 = vperm.slane %v26, 0
  %vm30 = vcmask 261120
  %v32 = vsel %vm30, %v20, 0
  %v35 = vsel %vm30, %v21, 0
  %37 = vmatpush.msra.mxu0 0.0
  %38 = vmatpush.msra.mxu0 0.0
  %39 = vmatpush.msra.mxu0 0.0
  %40 = vmatpush.msra.mxu0 0.0
  %41 = vmatpush.msra.mxu0 0.0
  %42 = vmatpush.msra.mxu0 0.0
  %43 = vmatpush.msra.mxu0 0.0
  %44 = vmatpush.msra.mxu0 0.0
  %45 = vmatpush.msra.mxu0 0.0
  %46 = vmatpush.msra.mxu0 0.0
  %47 = vmatpush.msra.mxu0 0.0
  %48 = vmatpush.msra.mxu0 0.0
  %49 = vmatpush.msra.mxu0 %v25
  %50 = vmatpush.msra.mxu0 %v24
  %51 = vmatpush.msra.mxu0 %v23
  %52 = vmatpush.msra.mxu0 %v22
  %53 = vmatmul.f32.gmra.mxu0 %v32
  %v54 = vpop.f32.mrf.mxu0
  %v55 = vadd.f32 %v28, %v54
  %56 = vmatmul.f32.gmra.mxu0 %v35
  %v57 = vpop.f32.mrf.mxu0
  %v58 = vadd.f32 %v28, %v57
  %59 = vdwg.mxu0
  %v60 = vtanh.pop %v55
  %v61 = vtanh.pop %v58
  %v62 = vld [vmem:[%s3] sm:$0xff]
  %v63 = vld [vmem:[%s3 + $0x8] sm:$0xff]
  %v64 = vld [vmem:[%s3 + $0x10] sm:$0xff]
  %v65 = vld [vmem:[%s3 + $0x18] sm:$0xff]
  %v66 = vld [vmem:[%s3 + $0x20] sm:$0xff]
  %v67 = vld [vmem:[%s3 + $0x28] sm:$0xff]
  %v68 = vld [vmem:[%s3 + $0x30] sm:$0xff]
  %v69 = vld [vmem:[%s3 + $0x38] sm:$0xff]
  %v70 = vld [vmem:[%s3 + $0x40] sm:$0xff]
  %v71 = vld [vmem:[%s3 + $0x48] sm:$0xff]
  %v72 = vld [vmem:[%s3 + $0x50] sm:$0xff]
  %v73 = vld [vmem:[%s3 + $0x58] sm:$0xff]
  %v74 = vld [vmem:[%s3 + $0x60] sm:$0xff]
  %v75 = vld [vmem:[%s3 + $0x68] sm:$0xff]
  %v76 = vld [vmem:[%s3 + $0x70] sm:$0xff]
  %v77 = vld [vmem:[%s3 + $0x78] sm:$0xff]
  %v78 = vld [vmem:[%s4] sm:$0x1]
  %v80 = vperm.slane %v78, 0
  %82 = vmatpush.msra.mxu0 %v77
  %83 = vmatpush.msra.mxu0 %v76
  %84 = vmatpush.msra.mxu0 %v75
  %85 = vmatpush.msra.mxu0 %v74
  %86 = vmatpush.msra.mxu0 %v73
  %87 = vmatpush.msra.mxu0 %v72
  %88 = vmatpush.msra.mxu0 %v71
  %89 = vmatpush.msra.mxu0 %v70
  %90 = vmatpush.msra.mxu0 %v69
  %91 = vmatpush.msra.mxu0 %v68
  %92 = vmatpush.msra.mxu0 %v67
  %93 = vmatpush.msra.mxu0 %v66
  %94 = vmatpush.msra.mxu0 %v65
  %95 = vmatpush.msra.mxu0 %v64
  %96 = vmatpush.msra.mxu0 %v63
  %97 = vmatpush.msra.mxu0 %v62
  %98 = vmatmul.f32.gmra.mxu0 %v60
  %v99 = vpop.f32.mrf.mxu0
  %v100 = vadd.f32 %v80, %v99
  %101 = vmatmul.f32.gmra.mxu0 %v61
  %v102 = vpop.f32.mrf.mxu0
  %v103 = vadd.f32 %v80, %v102
  %104 = vdwg.mxu0
  %vm105 = vcmask 31744
  %106 = vst.msk [vmem:[%s5] sm:$0xff] %vm105, %v100
  %107 = vst.msk [vmem:[%s5 + $0x8] sm:$0xff] %vm105, %v103
  // Predicated region
  $region22: #{tpu_custom_call.1} parent=0 // pred_check
    _
  $region23: #{tpu_custom_call.1} parent=0 // pred_check_branch
    %109 = sbr.rel (0) target = $region25
  $region24: #{tpu_custom_call.1} parent=0 // pred_region
    _
  $region25: #{tpu_custom_call.1} parent=0 // pred_fallthru
    _
  // Predicated region
  $region26: #{tpu_custom_call.1} parent=0 // pred_check
    _
  $region27: #{tpu_custom_call.1} parent=0 // pred_check_branch
    %111 = sbr.rel (0) target = $region29
  $region28: #{tpu_custom_call.1} parent=0 // pred_region
    _
  $region29: #{tpu_custom_call.1} parent=0 // pred_fallthru
    _

</llo_original>
